<compile_context>
chip_gen: v7x
topology: tpu7x:2x2x1
jax: 0.10.0
libtpu: 0.0.40
codegen_flags: <defaults>
</compile_context>

<pallas_src>
import functools
import math

import jax
import jax.numpy as jnp
from jax import lax
from jax.experimental import pallas as pl
from jax.experimental.pallas import tpu as pltpu

_LANES = 128


def _tensor_linear_kernel(x_ref, w_ref, b_ref, o_ref, *, k_total, mask_k):
    # x_ref: (tb*128, tk)  streamed input row/column block
    # w_ref: (1, tk)       resident weight chunk
    # b_ref: (tb, 128)     bias block (resident across the k axis)
    # o_ref: (tb, 128)     f32 output block, used as the k-axis accumulator
    rows, tk = x_ref.shape
    tb = rows // _LANES

    # Major-dim split at multiples of 128 rows (128 % 8 == 0): tile-preserving, free.
    x = x_ref[...].astype(jnp.float32).reshape(tb, _LANES, tk)
    w = w_ref[...].astype(jnp.float32)            # (1, tk)

    prod = x * w[jnp.newaxis, :, :]               # VPU elementwise, (tb, 128, tk)
    if mask_k:
        # Ragged last K block: stale VMEM lanes beyond k_total must not reach the sum.
        k0 = pl.program_id(1) * tk
        lane = lax.broadcasted_iota(jnp.int32, (tb, _LANES, tk), 2)
        prod = jnp.where(k0 + lane < k_total, prod, 0.0)

    # TODO(synk): for K <= ~64 this per-vreg cross-lane reduce leaves the XLU as the
    # saturating unit below HBM roofline; a row-packed layout (128//K rows per vreg
    # + segmented roll-reduce) or an MXU dot + relayout would recover it.
    partial = jnp.sum(prod, axis=-1)              # XLU lane reduce -> (tb, 128)

    @pl.when(pl.program_id(1) == 0)
    def _init():
        o_ref[...] = b_ref[...].astype(jnp.float32)

    o_ref[...] += partial


def tensor_linear(x, weight, bias=None):
    """x: (numnodes, nclass, in_features); weight: (in_features, 1);
    bias: (numnodes, nclass) or None.  Returns (numnodes, nclass) float32."""
    numnodes, nclass, in_features = x.shape
    k_dim, out_features = weight.shape
    assert k_dim == in_features
    # The PyTorch forward's reshape (i,j,r)->(i,j) is only well-defined for r == 1.
    assert out_features == 1, "TensorLinear.forward requires out_features == 1"

    M = numnodes * nclass
    num_groups = pl.cdiv(M, _LANES)               # 128-row groups (lane-dense output)
    itemsize = x.dtype.itemsize

    # --- Per-generation VMEM budgeting --------------------------------------
    try:
        vmem_cap = int(pltpu.get_tpu_info().vmem_capacity_bytes)
    except Exception:
        vmem_cap = 64 * 1024 * 1024               # conservative fallback (v7x per-TC)
    vmem_limit = min(int(vmem_cap * 0.85), 110 * 1024 * 1024)
    budget_base = int(vmem_cap * 0.70)
    # Worst-case live VMEM ~= 2 double-buffered x blocks + one f32 product of the
    # same block: 2*B + B*(4/itemsize) <= budget_base  =>  B as below (capped).
    x_budget = min(16 * 1024 * 1024, (budget_base * itemsize) // (2 * itemsize + 4))

    # VMEM stores the minor dim padded to 128 lanes (native (8,128) tiling).
    k_pad = pl.cdiv(in_features, _LANES) * _LANES
    bytes_per_group = _LANES * k_pad * itemsize   # one (128, K) row group in VMEM

    tb_min = min(8, num_groups)
    if tb_min * bytes_per_group <= x_budget:
        # Full K fits: tile over rows only.
        tk = in_features
        tb = x_budget // bytes_per_group
        if tb >= num_groups:
            tb = num_groups
        else:
            tb = (tb // 8) * 8                    # (tb,128) out/bias blocks need tb % 8 == 0
            # v7x megacore: keep >= 2 row blocks so both TensorCores get work.
            tb = min(tb, pl.cdiv(pl.cdiv(num_groups, 2), 8) * 8)
            tb = max(8, tb)
    else:
        # Large K: minimal row block, tile K on an inner reduction axis.
        tb = tb_min
        rows = tb * _LANES
        tk = (x_budget // (rows * itemsize) // _LANES) * _LANES
        tk = max(_LANES, min(tk, k_pad))
    grid_m = pl.cdiv(num_groups, tb)
    grid_k = pl.cdiv(in_features, tk)
    rows_block = tb * _LANES

    # --- Operand layout (no full-x copies) -----------------------------------
    x_flat = x.reshape(M, in_features)            # free reshape, stays in HBM
    w_row = weight.reshape(1, in_features)        # (K,1) -> (1,K), free

    m_pad = num_groups * _LANES
    if bias is None:
        b2 = jnp.zeros((num_groups, _LANES), jnp.float32)
    else:
        b_flat = bias.reshape(M)
        if m_pad != M:
            b_flat = jnp.pad(b_flat, (0, m_pad - M))   # bias is tiny; x is NOT padded
        b2 = b_flat.reshape(num_groups, _LANES)

    cost = pl.CostEstimate(
        flops=2 * M * in_features,
        bytes_accessed=(M * in_features * itemsize            # x
                        + in_features * weight.dtype.itemsize # weight
                        + M * b2.dtype.itemsize               # bias
                        + M * 4),                             # f32 output
        transcendentals=0,
    )

    kernel = functools.partial(
        _tensor_linear_kernel,
        k_total=in_features,
        mask_k=(in_features % tk != 0),
    )

    out2 = pl.pallas_call(
        kernel,
        out_shape=jax.ShapeDtypeStruct((num_groups, _LANES), jnp.float32),
        grid=(grid_m, grid_k),
        in_specs=[
            # x streamed in (tb*128, tk) blocks; ragged last blocks are masked.
            pl.BlockSpec((rows_block, tk), lambda i, k: (i, k)),
            # weight chunk (resident across the row axis).
            pl.BlockSpec((1, tk), lambda i, k: (0, k)),
            # bias block (resident across the k axis).
            pl.BlockSpec((tb, _LANES), lambda i, k: (i, 0)),
        ],
        # Same block index across the k axis -> output stays resident and accumulates.
        out_specs=pl.BlockSpec((tb, _LANES), lambda i, k: (i, 0)),
        compiler_params=pltpu.CompilerParams(
            dimension_semantics=("parallel", "arbitrary"),
            vmem_limit_bytes=vmem_limit,
        ),
        cost_estimate=cost,
    )(x_flat, w_row, b2)

    out_flat = out2.reshape(m_pad)
    if m_pad != M:
        out_flat = out_flat[:M]                   # drop rows computed from padding
    return out_flat.reshape(numnodes, nclass)


if __name__ == "__main__":
    # Small shapes consistent with the module's forward:
    #   input: (numnodes, nclass, in_features), weight: (in_features, 1),
    #   bias:  (numnodes, nclass)
    in_features, numnodes, nclass, out_features = 32, 8, 16, 1

    key = jax.random.PRNGKey(0)
    kx, kw, kb = jax.random.split(key, 3)

    # Deterministic init matching reset_parameters(): uniform(-stdv, stdv),
    # stdv = 1 / sqrt(out_features).
    stdv = 1.0 / math.sqrt(out_features)
    weight = jax.random.uniform(
        kw, (in_features, out_features), jnp.float32, minval=-stdv, maxval=stdv
    )
    bias = jax.random.uniform(
        kb, (numnodes, nclass), jnp.float32, minval=-stdv, maxval=stdv
    )
    x = jax.random.normal(kx, (numnodes, nclass, in_features), dtype=jnp.float32)

    out = jax.block_until_ready(tensor_linear(x, weight, bias))

    # Pure-JAX reference for correctness.
    ref = jnp.einsum("ijk,kr->ijr", x, weight).reshape(numnodes, nclass) + bias
    assert out.shape == (numnodes, nclass)
    assert jnp.allclose(out, ref, atol=1e-5, rtol=1e-5)

    print("KERNEL_OK")
</pallas_src>

<mosaic_0001>
module attributes {stable_mosaic.version = 11 : i64} {
  func.func @_tensor_linear_kernel(%arg0: i32, %arg1: i32, %arg2: memref<128x32xf32, #tpu.memory_space<vmem>>, %arg3: memref<1x32xf32, #tpu.memory_space<vmem>>, %arg4: memref<1x128xf32, #tpu.memory_space<vmem>>, %arg5: memref<1x128xf32, #tpu.memory_space<vmem>>) attributes {dimension_semantics = [#tpu.dimension_semantics<parallel>, #tpu.dimension_semantics<arbitrary>], iteration_bounds = array<i64: 1, 1>, scalar_prefetch = 0 : i64, scratch_operands = 0 : i64, tpu.core_type = #tpu.core_type<tc>, window_params = [{transform_indices = @transform_0, window_bounds = array<i64: 128, 32>}, {transform_indices = @transform_1, window_bounds = array<i64: 1, 32>}, {transform_indices = @transform_2, window_bounds = array<i64: 1, 128>}, {transform_indices = @transform_3, window_bounds = array<i64: 1, 128>}]} {
    %c0 = arith.constant 0 : index
    %c0_0 = arith.constant 0 : index
    %0 = vector.load %arg2[%c0, %c0_0] : memref<128x32xf32, #tpu.memory_space<vmem>>, vector<128x32xf32>
    %1 = vector.shape_cast %0 : vector<128x32xf32> to vector<1x128x32xf32>
    %c0_1 = arith.constant 0 : index
    %c0_2 = arith.constant 0 : index
    %2 = vector.load %arg3[%c0_1, %c0_2] : memref<1x32xf32, #tpu.memory_space<vmem>>, vector<1x32xf32>
    %3 = vector.shape_cast %2 : vector<1x32xf32> to vector<1x1x32xf32>
    %4 = vector.broadcast %3 : vector<1x1x32xf32> to vector<1x128x32xf32>
    %5 = arith.mulf %1, %4 : vector<1x128x32xf32>
    %cst = arith.constant dense<0.000000e+00> : vector<1x128xf32>
    %6 = vector.multi_reduction <add>, %5, %cst [2] : vector<1x128x32xf32> to vector<1x128xf32>
    %c0_i32 = arith.constant 0 : i32
    %7 = arith.cmpi eq, %arg1, %c0_i32 : i32
    %8 = arith.extui %7 : i1 to i32
    %c0_i32_3 = arith.constant 0 : i32
    %9 = arith.cmpi ne, %8, %c0_i32_3 : i32
    scf.if %9 {
      %c0_8 = arith.constant 0 : index
      %c0_9 = arith.constant 0 : index
      %13 = vector.load %arg4[%c0_8, %c0_9] : memref<1x128xf32, #tpu.memory_space<vmem>>, vector<1x128xf32>
      %c0_10 = arith.constant 0 : index
      %c0_11 = arith.constant 0 : index
      %14 = vector.load %arg5[%c0_10, %c0_11] : memref<1x128xf32, #tpu.memory_space<vmem>>, vector<1x128xf32>
      tpu.vector_store %arg5[%c0_10, %c0_11], %13 {strides = array<i32>} : memref<1x128xf32, #tpu.memory_space<vmem>>, vector<1x128xf32>,
    } else {
    }
    %c0_4 = arith.constant 0 : index
    %c0_5 = arith.constant 0 : index
    %10 = vector.load %arg5[%c0_4, %c0_5] : memref<1x128xf32, #tpu.memory_space<vmem>>, vector<1x128xf32>
    %11 = arith.addf %10, %6 : vector<1x128xf32>
    %c0_6 = arith.constant 0 : index
    %c0_7 = arith.constant 0 : index
    %12 = vector.load %arg5[%c0_6, %c0_7] : memref<1x128xf32, #tpu.memory_space<vmem>>, vector<1x128xf32>
    tpu.vector_store %arg5[%c0_6, %c0_7], %11 {strides = array<i32>} : memref<1x128xf32, #tpu.memory_space<vmem>>, vector<1x128xf32>,
    return
  }
  func.func @transform_0(%arg0: i32, %arg1: i32) -> (i32, i32) {
    %c0_i32 = arith.constant 0 : i32
    return %arg0, %arg1 : i32, i32
  }
  func.func @transform_1(%arg0: i32, %arg1: i32) -> (i32, i32) {
    %c0_i32 = arith.constant 0 : i32
    %c0_i32_0 = arith.constant 0 : i32
    return %c0_i32, %arg1 : i32, i32
  }
  func.func @transform_2(%arg0: i32, %arg1: i32) -> (i32, i32) {
    %c0_i32 = arith.constant 0 : i32
    %c0_i32_0 = arith.constant 0 : i32
    return %arg0, %c0_i32 : i32, i32
  }
  func.func @transform_3(%arg0: i32, %arg1: i32) -> (i32, i32) {
    %c0_i32 = arith.constant 0 : i32
    %c0_i32_0 = arith.constant 0 : i32
    return %arg0, %c0_i32 : i32, i32
  }
}

</mosaic_0001>

<llo_original>
// kernel: tpu_custom_call.1
$region0: #{tpu_custom_call.1}
  #allocation0 [shape = 'u32[]', space=smem, size = 0x4, offset = 0x4, fixed_abs, tag = 'smem constant byte address 0x4 - core index']
  #allocation1 [shape = 'u32[144,128]{1,0:T(1,128)}', space=vmem, size = 0x12000, scoped, tag = 'internal scratch']
  %s0 = inlined_call_operand.vmem [shape: f32[128,32], index: 0, kind: input, shape index: {}]
  %s1 = inlined_call_operand.vmem [shape: f32[1,32], index: 1, kind: input, shape index: {}]
  %s2 = inlined_call_operand.vmem [shape: f32[1,128], index: 2, kind: input, shape index: {}]
  %s3 = inlined_call_operand.hbm [shape: f32[1,128], index: 3, kind: output, shape index: {}]
  %s4 = sld [smem:[#allocation0]]
  $region26: #{tpu_custom_call.1} parent=0
    _
  %s6 = ssub.s32 1, %s4
  %s7 = scalar_select 0, %s6, %s4
  $region1: #{tpu_custom_call.1} parent=0
    #allocation2 [shape = 'u8[512]{0}', space=vmem, size = 0x400, scoped, tag = 'output window, operand 0, single buffered']
    #allocation3 [shape = 's32[1]{0}', space=sflag, size = 0x4, scoped, tag = 'scoped memory for tpu_custom_call.1']
    %8 = vsyncpa [#allocation3], 0
    // Predicated region
    $region2: #{tpu_custom_call.1} parent=1 // pred_check
      _
    $region3: #{tpu_custom_call.1} parent=1 // pred_check_branch
      %10 = sbr.rel (0) target = $region5
    $region4: #{tpu_custom_call.1} parent=1 // pred_region
      _
    $region5: #{tpu_custom_call.1} parent=1 // pred_fallthru
      _
    // Predicated region
    $region6: #{tpu_custom_call.1} parent=1 // pred_check
      _
    $region7: #{tpu_custom_call.1} parent=1 // pred_check_branch
      %12 = sbr.rel (0) target = $region9
    $region8: #{tpu_custom_call.1} parent=1 // pred_region
      _
    $region9: #{tpu_custom_call.1} parent=1 // pred_fallthru
      _
    // Predicated region
    $region10: #{tpu_custom_call.1} parent=1 // pred_check
      _
    $region11: #{tpu_custom_call.1} parent=1 // pred_check_branch
      %14 = sbr.rel (0) target = $region13
    $region12: #{tpu_custom_call.1} parent=1 // pred_region
      _
    $region13: #{tpu_custom_call.1} parent=1 // pred_fallthru
      _
    %v15 = vld [vmem:[%s0] sm:$0xff]
    %v16 = vld [vmem:[%s0 + $0x8] sm:$0xff]
    %v17 = vld [vmem:[%s0 + $0x10] sm:$0xff]
    %v18 = vld [vmem:[%s0 + $0x18] sm:$0xff]
    %v19 = vld [vmem:[%s0 + $0x20] sm:$0xff]
    %v20 = vld [vmem:[%s0 + $0x28] sm:$0xff]
    %v21 = vld [vmem:[%s0 + $0x30] sm:$0xff]
    %v22 = vld [vmem:[%s0 + $0x38] sm:$0xff]
    %v23 = vld [vmem:[%s0 + $0x40] sm:$0xff]
    %v24 = vld [vmem:[%s0 + $0x48] sm:$0xff]
    %v25 = vld [vmem:[%s0 + $0x50] sm:$0xff]
    %v26 = vld [vmem:[%s0 + $0x58] sm:$0xff]
    %v27 = vld [vmem:[%s0 + $0x60] sm:$0xff]
    %v28 = vld [vmem:[%s0 + $0x68] sm:$0xff]
    %v29 = vld [vmem:[%s0 + $0x70] sm:$0xff]
    %v30 = vld [vmem:[%s0 + $0x78] sm:$0xff]
    %v31 = vld [vmem:[%s1] sm:$0x1]
    %v33 = vlaneseq
    %v34 = vshrl.u32 %v33, 7
    %v35 = vsub.s32 0, %v34
    %v36 = vrot.slane %v31, %v35
    %v38 = vmul.f32 %v15, %v36
    %v39 = vmul.f32 %v16, %v36
    %v40 = vmul.f32 %v17, %v36
    %v41 = vmul.f32 %v18, %v36
    %v42 = vmul.f32 %v19, %v36
    %v43 = vmul.f32 %v20, %v36
    %v44 = vmul.f32 %v21, %v36
    %v45 = vmul.f32 %v22, %v36
    %v46 = vmul.f32 %v23, %v36
    %v47 = vmul.f32 %v24, %v36
    %v48 = vmul.f32 %v25, %v36
    %v49 = vmul.f32 %v26, %v36
    %v50 = vmul.f32 %v27, %v36
    %v51 = vmul.f32 %v28, %v36
    %v52 = vmul.f32 %v29, %v36
    %v53 = vmul.f32 %v30, %v36
    %vm54 = vcmask 261120
    %v55 = vsel %vm54, %v38, 0.0
    %56 = vadd.xlane.f32.xlu0 %v55
    %v57 = vpop.xlane.xlu0 %56
    %v58 = vsel %vm54, %v39, 0.0
    %59 = vadd.xlane.f32.xlu0 %v58
    %v60 = vpop.xlane.xlu0 %59
    %v61 = vsel %vm54, %v40, 0.0
    %62 = vadd.xlane.f32.xlu0 %v61
    %v63 = vpop.xlane.xlu0 %62
    %v64 = vsel %vm54, %v41, 0.0
    %65 = vadd.xlane.f32.xlu0 %v64
    %v66 = vpop.xlane.xlu0 %65
    %v67 = vsel %vm54, %v42, 0.0
    %68 = vadd.xlane.f32.xlu0 %v67
    %v69 = vpop.xlane.xlu0 %68
    %v70 = vsel %vm54, %v43, 0.0
    %71 = vadd.xlane.f32.xlu0 %v70
    %v72 = vpop.xlane.xlu0 %71
    %v73 = vsel %vm54, %v44, 0.0
    %74 = vadd.xlane.f32.xlu0 %v73
    %v75 = vpop.xlane.xlu0 %74
    %v76 = vsel %vm54, %v45, 0.0
    %77 = vadd.xlane.f32.xlu0 %v76
    %v78 = vpop.xlane.xlu0 %77
    %v79 = vsel %vm54, %v46, 0.0
    %80 = vadd.xlane.f32.xlu0 %v79
    %v81 = vpop.xlane.xlu0 %80
    %v82 = vsel %vm54, %v47, 0.0
    %83 = vadd.xlane.f32.xlu0 %v82
    %v84 = vpop.xlane.xlu0 %83
    %v85 = vsel %vm54, %v48, 0.0
    %86 = vadd.xlane.f32.xlu0 %v85
    %v87 = vpop.xlane.xlu0 %86
    %v88 = vsel %vm54, %v49, 0.0
    %89 = vadd.xlane.f32.xlu0 %v88
    %v90 = vpop.xlane.xlu0 %89
    %v91 = vsel %vm54, %v50, 0.0
    %92 = vadd.xlane.f32.xlu0 %v91
    %v93 = vpop.xlane.xlu0 %92
    %v94 = vsel %vm54, %v51, 0.0
    %95 = vadd.xlane.f32.xlu0 %v94
    %v96 = vpop.xlane.xlu0 %95
    %v97 = vsel %vm54, %v52, 0.0
    %98 = vadd.xlane.f32.xlu0 %v97
    %v99 = vpop.xlane.xlu0 %98
    %v100 = vsel %vm54, %v53, 0.0
    %101 = vadd.xlane.f32.xlu0 %v100
    %v102 = vpop.xlane.xlu0 %101
    %p103 = scmp.eq.s32.totalorder 0, 0
    // Predicated region
    $region14: #{tpu_custom_call.1} parent=1 // pred_check
      %p104 = pneg %p103
    $region15: #{tpu_custom_call.1} parent=1 // pred_check_branch
      %106 = sbr.rel (%p104) target = $region17
    $region16: #{tpu_custom_call.1} parent=1 // pred_region
      %v107 = vld [vmem:[%s2] sm:$0x1]
      %108 = vst [vmem:[#allocation2] sm:$0x1] %v107
    $region17: #{tpu_custom_call.1} parent=1 // pred_fallthru
      _
    %v109 = vld [vmem:[#allocation2] sm:$0x1]
    %v126 = vlaneseq
    %v127 = vshrl.u32 %v126, 7
    %v128 = vsub.s32 0, %v127
    %v129 = vrot.slane %v57, %v128
    %v130 = vlaneseq
    %v131 = vshrl.u32 %v130, 7
    %v132 = vsub.s32 1, %v131
    %v133 = vrot.slane %v57, %v132
    %v134 = vlaneseq
    %v135 = vshrl.u32 %v134, 7
    %v136 = vsub.s32 2, %v135
    %v137 = vrot.slane %v57, %v136
    %v138 = vlaneseq
    %v139 = vshrl.u32 %v138, 7
    %v140 = vsub.s32 3, %v139
    %v141 = vrot.slane %v57, %v140
    %v142 = vlaneseq
    %v143 = vshrl.u32 %v142, 7
    %v144 = vsub.s32 4, %v143
    %v145 = vrot.slane %v57, %v144
    %v146 = vlaneseq
    %v147 = vshrl.u32 %v146, 7
    %v148 = vsub.s32 5, %v147
    %v149 = vrot.slane %v57, %v148
    %v150 = vlaneseq
    %v151 = vshrl.u32 %v150, 7
    %v152 = vsub.s32 6, %v151
    %v153 = vrot.slane %v57, %v152
    %v154 = vlaneseq
    %v155 = vshrl.u32 %v154, 7
    %v156 = vsub.s32 7, %v155
    %v157 = vrot.slane %v57, %v156
    %v158 = vlaneseq
    %v159 = vshrl.u32 %v158, 7
    %v160 = vsub.s32 0, %v159
    %v161 = vrot.slane %v60, %v160
    %v162 = vlaneseq
    %v163 = vshrl.u32 %v162, 7
    %v164 = vsub.s32 1, %v163
    %v165 = vrot.slane %v60, %v164
    %v166 = vlaneseq
    %v167 = vshrl.u32 %v166, 7
    %v168 = vsub.s32 2, %v167
    %v169 = vrot.slane %v60, %v168
    %v170 = vlaneseq
    %v171 = vshrl.u32 %v170, 7
    %v172 = vsub.s32 3, %v171
    %v173 = vrot.slane %v60, %v172
    %v174 = vlaneseq
    %v175 = vshrl.u32 %v174, 7
    %v176 = vsub.s32 4, %v175
    %v177 = vrot.slane %v60, %v176
    %v178 = vlaneseq
    %v179 = vshrl.u32 %v178, 7
    %v180 = vsub.s32 5, %v179
    %v181 = vrot.slane %v60, %v180
    %v182 = vlaneseq
    %v183 = vshrl.u32 %v182, 7
    %v184 = vsub.s32 6, %v183
    %v185 = vrot.slane %v60, %v184
    %v186 = vlaneseq
    %v187 = vshrl.u32 %v186, 7
    %v188 = vsub.s32 7, %v187
    %v189 = vrot.slane %v60, %v188
    %v190 = vlaneseq
    %v191 = vshrl.u32 %v190, 7
    %v192 = vsub.s32 0, %v191
    %v193 = vrot.slane %v63, %v192
    %v194 = vlaneseq
    %v195 = vshrl.u32 %v194, 7
    %v196 = vsub.s32 1, %v195
    %v197 = vrot.slane %v63, %v196
    %v198 = vlaneseq
    %v199 = vshrl.u32 %v198, 7
    %v200 = vsub.s32 2, %v199
    %v201 = vrot.slane %v63, %v200
    %v202 = vlaneseq
    %v203 = vshrl.u32 %v202, 7
    %v204 = vsub.s32 3, %v203
    %v205 = vrot.slane %v63, %v204
    %v206 = vlaneseq
    %v207 = vshrl.u32 %v206, 7
    %v208 = vsub.s32 4, %v207
    %v209 = vrot.slane %v63, %v208
    %v210 = vlaneseq
    %v211 = vshrl.u32 %v210, 7
    %v212 = vsub.s32 5, %v211
    %v213 = vrot.slane %v63, %v212
    %v214 = vlaneseq
    %v215 = vshrl.u32 %v214, 7
    %v216 = vsub.s32 6, %v215
    %v217 = vrot.slane %v63, %v216
    %v218 = vlaneseq
    %v219 = vshrl.u32 %v218, 7
    %v220 = vsub.s32 7, %v219
    %v221 = vrot.slane %v63, %v220
    %v222 = vlaneseq
    %v223 = vshrl.u32 %v222, 7
    %v224 = vsub.s32 0, %v223
    %v225 = vrot.slane %v66, %v224
    %v226 = vlaneseq
    %v227 = vshrl.u32 %v226, 7
    %v228 = vsub.s32 1, %v227
    %v229 = vrot.slane %v66, %v228
    %v230 = vlaneseq
    %v231 = vshrl.u32 %v230, 7
    %v232 = vsub.s32 2, %v231
    %v233 = vrot.slane %v66, %v232
    %v234 = vlaneseq
    %v235 = vshrl.u32 %v234, 7
    %v236 = vsub.s32 3, %v235
    %v237 = vrot.slane %v66, %v236
    %v238 = vlaneseq
    %v239 = vshrl.u32 %v238, 7
    %v240 = vsub.s32 4, %v239
    %v241 = vrot.slane %v66, %v240
    %v242 = vlaneseq
    %v243 = vshrl.u32 %v242, 7
    %v244 = vsub.s32 5, %v243
    %v245 = vrot.slane %v66, %v244
    %v246 = vlaneseq
    %v247 = vshrl.u32 %v246, 7
    %v248 = vsub.s32 6, %v247
    %v249 = vrot.slane %v66, %v248
    %v250 = vlaneseq
    %v251 = vshrl.u32 %v250, 7
    %v252 = vsub.s32 7, %v251
    %v253 = vrot.slane %v66, %v252
    %v254 = vlaneseq
    %v255 = vshrl.u32 %v254, 7
    %v256 = vsub.s32 0, %v255
    %v257 = vrot.slane %v69, %v256
    %v258 = vlaneseq
    %v259 = vshrl.u32 %v258, 7
    %v260 = vsub.s32 1, %v259
    %v261 = vrot.slane %v69, %v260
    %v262 = vlaneseq
    %v263 = vshrl.u32 %v262, 7
    %v264 = vsub.s32 2, %v263
    %v265 = vrot.slane %v69, %v264
    %v266 = vlaneseq
    %v267 = vshrl.u32 %v266, 7
    %v268 = vsub.s32 3, %v267
    %v269 = vrot.slane %v69, %v268
    %v270 = vlaneseq
    %v271 = vshrl.u32 %v270, 7
    %v272 = vsub.s32 4, %v271
    %v273 = vrot.slane %v69, %v272
    %v274 = vlaneseq
    %v275 = vshrl.u32 %v274, 7
    %v276 = vsub.s32 5, %v275
    %v277 = vrot.slane %v69, %v276
    %v278 = vlaneseq
    %v279 = vshrl.u32 %v278, 7
    %v280 = vsub.s32 6, %v279
    %v281 = vrot.slane %v69, %v280
    %v282 = vlaneseq
    %v283 = vshrl.u32 %v282, 7
    %v284 = vsub.s32 7, %v283
    %v285 = vrot.slane %v69, %v284
    %v286 = vlaneseq
    %v287 = vshrl.u32 %v286, 7
    %v288 = vsub.s32 0, %v287
    %v289 = vrot.slane %v72, %v288
    %v290 = vlaneseq
    %v291 = vshrl.u32 %v290, 7
    %v292 = vsub.s32 1, %v291
    %v293 = vrot.slane %v72, %v292
    %v294 = vlaneseq
    %v295 = vshrl.u32 %v294, 7
    %v296 = vsub.s32 2, %v295
    %v297 = vrot.slane %v72, %v296
    %v298 = vlaneseq
    %v299 = vshrl.u32 %v298, 7
    %v300 = vsub.s32 3, %v299
    %v301 = vrot.slane %v72, %v300
    %v302 = vlaneseq
    %v303 = vshrl.u32 %v302, 7
    %v304 = vsub.s32 4, %v303
    %v305 = vrot.slane %v72, %v304
    %v306 = vlaneseq
    %v307 = vshrl.u32 %v306, 7
    %v308 = vsub.s32 5, %v307
    %v309 = vrot.slane %v72, %v308
    %v310 = vlaneseq
    %v311 = vshrl.u32 %v310, 7
    %v312 = vsub.s32 6, %v311
    %v313 = vrot.slane %v72, %v312
    %v314 = vlaneseq
    %v315 = vshrl.u32 %v314, 7
    %v316 = vsub.s32 7, %v315
    %v317 = vrot.slane %v72, %v316
    %v318 = vlaneseq
    %v319 = vshrl.u32 %v318, 7
    %v320 = vsub.s32 0, %v319
    %v321 = vrot.slane %v75, %v320
    %v322 = vlaneseq
    %v323 = vshrl.u32 %v322, 7
    %v324 = vsub.s32 1, %v323
    %v325 = vrot.slane %v75, %v324
    %v326 = vlaneseq
    %v327 = vshrl.u32 %v326, 7
    %v328 = vsub.s32 2, %v327
    %v329 = vrot.slane %v75, %v328
    %v330 = vlaneseq
    %v331 = vshrl.u32 %v330, 7
    %v332 = vsub.s32 3, %v331
    %v333 = vrot.slane %v75, %v332
    %v334 = vlaneseq
    %v335 = vshrl.u32 %v334, 7
    %v336 = vsub.s32 4, %v335
    %v337 = vrot.slane %v75, %v336
    %v338 = vlaneseq
    %v339 = vshrl.u32 %v338, 7
    %v340 = vsub.s32 5, %v339
    %v341 = vrot.slane %v75, %v340
    %v342 = vlaneseq
    %v343 = vshrl.u32 %v342, 7
    %v344 = vsub.s32 6, %v343
    %v345 = vrot.slane %v75, %v344
    %v346 = vlaneseq
    %v347 = vshrl.u32 %v346, 7
    %v348 = vsub.s32 7, %v347
    %v349 = vrot.slane %v75, %v348
    %v350 = vlaneseq
    %v351 = vshrl.u32 %v350, 7
    %v352 = vsub.s32 0, %v351
    %v353 = vrot.slane %v78, %v352
    %v354 = vlaneseq
    %v355 = vshrl.u32 %v354, 7
    %v356 = vsub.s32 1, %v355
    %v357 = vrot.slane %v78, %v356
    %v358 = vlaneseq
    %v359 = vshrl.u32 %v358, 7
    %v360 = vsub.s32 2, %v359
    %v361 = vrot.slane %v78, %v360
    %v362 = vlaneseq
    %v363 = vshrl.u32 %v362, 7
    %v364 = vsub.s32 3, %v363
    %v365 = vrot.slane %v78, %v364
    %v366 = vlaneseq
    %v367 = vshrl.u32 %v366, 7
    %v368 = vsub.s32 4, %v367
    %v369 = vrot.slane %v78, %v368
    %v370 = vlaneseq
    %v371 = vshrl.u32 %v370, 7
    %v372 = vsub.s32 5, %v371
    %v373 = vrot.slane %v78, %v372
    %v374 = vlaneseq
    %v375 = vshrl.u32 %v374, 7
    %v376 = vsub.s32 6, %v375
    %v377 = vrot.slane %v78, %v376
    %v378 = vlaneseq
    %v379 = vshrl.u32 %v378, 7
    %v380 = vsub.s32 7, %v379
    %v381 = vrot.slane %v78, %v380
    %v382 = vlaneseq
    %v383 = vshrl.u32 %v382, 7
    %v384 = vsub.s32 0, %v383
    %v385 = vrot.slane %v81, %v384
    %v386 = vlaneseq
    %v387 = vshrl.u32 %v386, 7
    %v388 = vsub.s32 1, %v387
    %v389 = vrot.slane %v81, %v388
    %v390 = vlaneseq
    %v391 = vshrl.u32 %v390, 7
    %v392 = vsub.s32 2, %v391
    %v393 = vrot.slane %v81, %v392
    %v394 = vlaneseq
    %v395 = vshrl.u32 %v394, 7
    %v396 = vsub.s32 3, %v395
    %v397 = vrot.slane %v81, %v396
    %v398 = vlaneseq
    %v399 = vshrl.u32 %v398, 7
    %v400 = vsub.s32 4, %v399
    %v401 = vrot.slane %v81, %v400
    %v402 = vlaneseq
    %v403 = vshrl.u32 %v402, 7
    %v404 = vsub.s32 5, %v403
    %v405 = vrot.slane %v81, %v404
    %v406 = vlaneseq
    %v407 = vshrl.u32 %v406, 7
    %v408 = vsub.s32 6, %v407
    %v409 = vrot.slane %v81, %v408
    %v410 = vlaneseq
    %v411 = vshrl.u32 %v410, 7
    %v412 = vsub.s32 7, %v411
    %v413 = vrot.slane %v81, %v412
    %v414 = vlaneseq
    %v415 = vshrl.u32 %v414, 7
    %v416 = vsub.s32 0, %v415
    %v417 = vrot.slane %v84, %v416
    %v418 = vlaneseq
    %v419 = vshrl.u32 %v418, 7
    %v420 = vsub.s32 1, %v419
    %v421 = vrot.slane %v84, %v420
    %v422 = vlaneseq
    %v423 = vshrl.u32 %v422, 7
    %v424 = vsub.s32 2, %v423
    %v425 = vrot.slane %v84, %v424
    %v426 = vlaneseq
    %v427 = vshrl.u32 %v426, 7
    %v428 = vsub.s32 3, %v427
    %v429 = vrot.slane %v84, %v428
    %v430 = vlaneseq
    %v431 = vshrl.u32 %v430, 7
    %v432 = vsub.s32 4, %v431
    %v433 = vrot.slane %v84, %v432
    %v434 = vlaneseq
    %v435 = vshrl.u32 %v434, 7
    %v436 = vsub.s32 5, %v435
    %v437 = vrot.slane %v84, %v436
    %v438 = vlaneseq
    %v439 = vshrl.u32 %v438, 7
    %v440 = vsub.s32 6, %v439
    %v441 = vrot.slane %v84, %v440
    %v442 = vlaneseq
    %v443 = vshrl.u32 %v442, 7
    %v444 = vsub.s32 7, %v443
    %v445 = vrot.slane %v84, %v444
    %v446 = vlaneseq
    %v447 = vshrl.u32 %v446, 7
    %v448 = vsub.s32 0, %v447
    %v449 = vrot.slane %v87, %v448
    %v450 = vlaneseq
    %v451 = vshrl.u32 %v450, 7
    %v452 = vsub.s32 1, %v451
    %v453 = vrot.slane %v87, %v452
    %v454 = vlaneseq
    %v455 = vshrl.u32 %v454, 7
    %v456 = vsub.s32 2, %v455
    %v457 = vrot.slane %v87, %v456
    %v458 = vlaneseq
    %v459 = vshrl.u32 %v458, 7
    %v460 = vsub.s32 3, %v459
    %v461 = vrot.slane %v87, %v460
    %v462 = vlaneseq
    %v463 = vshrl.u32 %v462, 7
    %v464 = vsub.s32 4, %v463
    %v465 = vrot.slane %v87, %v464
    %v466 = vlaneseq
    %v467 = vshrl.u32 %v466, 7
    %v468 = vsub.s32 5, %v467
    %v469 = vrot.slane %v87, %v468
    %v470 = vlaneseq
    %v471 = vshrl.u32 %v470, 7
    %v472 = vsub.s32 6, %v471
    %v473 = vrot.slane %v87, %v472
    %v474 = vlaneseq
    %v475 = vshrl.u32 %v474, 7
    %v476 = vsub.s32 7, %v475
    %v477 = vrot.slane %v87, %v476
    %v478 = vlaneseq
    %v479 = vshrl.u32 %v478, 7
    %v480 = vsub.s32 0, %v479
    %v481 = vrot.slane %v90, %v480
    %v482 = vlaneseq
    %v483 = vshrl.u32 %v482, 7
    %v484 = vsub.s32 1, %v483
    %v485 = vrot.slane %v90, %v484
    %v486 = vlaneseq
    %v487 = vshrl.u32 %v486, 7
    %v488 = vsub.s32 2, %v487
    %v489 = vrot.slane %v90, %v488
    %v490 = vlaneseq
    %v491 = vshrl.u32 %v490, 7
    %v492 = vsub.s32 3, %v491
    %v493 = vrot.slane %v90, %v492
    %v494 = vlaneseq
    %v495 = vshrl.u32 %v494, 7
    %v496 = vsub.s32 4, %v495
    %v497 = vrot.slane %v90, %v496
    %v498 = vlaneseq
    %v499 = vshrl.u32 %v498, 7
    %v500 = vsub.s32 5, %v499
    %v501 = vrot.slane %v90, %v500
    %v502 = vlaneseq
    %v503 = vshrl.u32 %v502, 7
    %v504 = vsub.s32 6, %v503
    %v505 = vrot.slane %v90, %v504
    %v506 = vlaneseq
    %v507 = vshrl.u32 %v506, 7
    %v508 = vsub.s32 7, %v507
    %v509 = vrot.slane %v90, %v508
    %v510 = vlaneseq
    %v511 = vshrl.u32 %v510, 7
    %v512 = vsub.s32 0, %v511
    %v513 = vrot.slane %v93, %v512
    %v514 = vlaneseq
    %v515 = vshrl.u32 %v514, 7
    %v516 = vsub.s32 1, %v515
    %v517 = vrot.slane %v93, %v516
    %v518 = vlaneseq
    %v519 = vshrl.u32 %v518, 7
    %v520 = vsub.s32 2, %v519
    %v521 = vrot.slane %v93, %v520
    %v522 = vlaneseq
    %v523 = vshrl.u32 %v522, 7
    %v524 = vsub.s32 3, %v523
    %v525 = vrot.slane %v93, %v524
    %v526 = vlaneseq
    %v527 = vshrl.u32 %v526, 7
    %v528 = vsub.s32 4, %v527
    %v529 = vrot.slane %v93, %v528
    %v530 = vlaneseq
    %v531 = vshrl.u32 %v530, 7
    %v532 = vsub.s32 5, %v531
    %v533 = vrot.slane %v93, %v532
    %v534 = vlaneseq
    %v535 = vshrl.u32 %v534, 7
    %v536 = vsub.s32 6, %v535
    %v537 = vrot.slane %v93, %v536
    %v538 = vlaneseq
    %v539 = vshrl.u32 %v538, 7
    %v540 = vsub.s32 7, %v539
    %v541 = vrot.slane %v93, %v540
    %v542 = vlaneseq
    %v543 = vshrl.u32 %v542, 7
    %v544 = vsub.s32 0, %v543
    %v545 = vrot.slane %v96, %v544
    %v546 = vlaneseq
    %v547 = vshrl.u32 %v546, 7
    %v548 = vsub.s32 1, %v547
    %v549 = vrot.slane %v96, %v548
    %v550 = vlaneseq
    %v551 = vshrl.u32 %v550, 7
    %v552 = vsub.s32 2, %v551
    %v553 = vrot.slane %v96, %v552
    %v554 = vlaneseq
    %v555 = vshrl.u32 %v554, 7
    %v556 = vsub.s32 3, %v555
    %v557 = vrot.slane %v96, %v556
    %v558 = vlaneseq
    %v559 = vshrl.u32 %v558, 7
    %v560 = vsub.s32 4, %v559
    %v561 = vrot.slane %v96, %v560
    %v562 = vlaneseq
    %v563 = vshrl.u32 %v562, 7
    %v564 = vsub.s32 5, %v563
    %v565 = vrot.slane %v96, %v564
    %v566 = vlaneseq
    %v567 = vshrl.u32 %v566, 7
    %v568 = vsub.s32 6, %v567
    %v569 = vrot.slane %v96, %v568
    %v570 = vlaneseq
    %v571 = vshrl.u32 %v570, 7
    %v572 = vsub.s32 7, %v571
    %v573 = vrot.slane %v96, %v572
    %v574 = vlaneseq
    %v575 = vshrl.u32 %v574, 7
    %v576 = vsub.s32 0, %v575
    %v577 = vrot.slane %v99, %v576
    %v578 = vlaneseq
    %v579 = vshrl.u32 %v578, 7
    %v580 = vsub.s32 1, %v579
    %v581 = vrot.slane %v99, %v580
    %v582 = vlaneseq
    %v583 = vshrl.u32 %v582, 7
    %v584 = vsub.s32 2, %v583
    %v585 = vrot.slane %v99, %v584
    %v586 = vlaneseq
    %v587 = vshrl.u32 %v586, 7
    %v588 = vsub.s32 3, %v587
    %v589 = vrot.slane %v99, %v588
    %v590 = vlaneseq
    %v591 = vshrl.u32 %v590, 7
    %v592 = vsub.s32 4, %v591
    %v593 = vrot.slane %v99, %v592
    %v594 = vlaneseq
    %v595 = vshrl.u32 %v594, 7
    %v596 = vsub.s32 5, %v595
    %v597 = vrot.slane %v99, %v596
    %v598 = vlaneseq
    %v599 = vshrl.u32 %v598, 7
    %v600 = vsub.s32 6, %v599
    %v601 = vrot.slane %v99, %v600
    %v602 = vlaneseq
    %v603 = vshrl.u32 %v602, 7
    %v604 = vsub.s32 7, %v603
    %v605 = vrot.slane %v99, %v604
    %v606 = vlaneseq
    %v607 = vshrl.u32 %v606, 7
    %v608 = vsub.s32 0, %v607
    %v609 = vrot.slane %v102, %v608
    %v610 = vlaneseq
    %v611 = vshrl.u32 %v610, 7
    %v612 = vsub.s32 1, %v611
    %v613 = vrot.slane %v102, %v612
    %v614 = vlaneseq
    %v615 = vshrl.u32 %v614, 7
    %v616 = vsub.s32 2, %v615
    %v617 = vrot.slane %v102, %v616
    %v618 = vlaneseq
    %v619 = vshrl.u32 %v618, 7
    %v620 = vsub.s32 3, %v619
    %v621 = vrot.slane %v102, %v620
    %v622 = vlaneseq
    %v623 = vshrl.u32 %v622, 7
    %v624 = vsub.s32 4, %v623
    %v625 = vrot.slane %v102, %v624
    %v626 = vlaneseq
    %v627 = vshrl.u32 %v626, 7
    %v628 = vsub.s32 5, %v627
    %v629 = vrot.slane %v102, %v628
    %v630 = vlaneseq
    %v631 = vshrl.u32 %v630, 7
    %v632 = vsub.s32 6, %v631
    %v633 = vrot.slane %v102, %v632
    %v634 = vlaneseq
    %v635 = vshrl.u32 %v634, 7
    %v636 = vsub.s32 7, %v635
    %v637 = vrot.slane %v102, %v636
    %v638 = vcombine.low %v129, %v133
    %v639 = vcombine.low %v137, %v141
    %v640 = vcombine.low %v145, %v149
    %v641 = vcombine.low %v153, %v157
    %v643 = vunpack.c.l.s4 1966171168
    %v644 = vunpack.c.0.s8 %v643
    %v645 = vlaneseq
    %v646 = vshrl.u32 %v645, 7
    %v647 = vsub.s32 %v644, %v646
    %v648 = vrot.slane %v638, %v647
    %v650 = vunpack.c.l.s4 1966171168
    %v651 = vunpack.c.0.s8 %v650
    %v652 = vlaneseq
    %v653 = vshrl.u32 %v652, 7
    %v654 = vsub.s32 %v651, %v653
    %v655 = vrot.slane %v639, %v654
    %v657 = vunpack.c.l.s4 1966171168
    %v658 = vunpack.c.0.s8 %v657
    %v659 = vlaneseq
    %v660 = vshrl.u32 %v659, 7
    %v661 = vsub.s32 %v658, %v660
    %v662 = vrot.slane %v640, %v661
    %v664 = vunpack.c.l.s4 1966171168
    %v665 = vunpack.c.0.s8 %v664
    %v666 = vlaneseq
    %v667 = vshrl.u32 %v666, 7
    %v668 = vsub.s32 %v665, %v667
    %v669 = vrot.slane %v641, %v668
    %v670 = vcombine.low %v648, %v655
    %v671 = vcombine.low %v662, %v669
    %v673 = vunpack.c.l.s4 1966171168
    %v674 = vunpack.c.0.s8 %v673
    %v675 = vlaneseq
    %v676 = vshrl.u32 %v675, 7
    %v677 = vsub.s32 %v674, %v676
    %v678 = vrot.slane %v670, %v677
    %v680 = vunpack.c.l.s4 1966171168
    %v681 = vunpack.c.0.s8 %v680
    %v682 = vlaneseq
    %v683 = vshrl.u32 %v682, 7
    %v684 = vsub.s32 %v681, %v683
    %v685 = vrot.slane %v671, %v684
    %v686 = vcombine.low %v678, %v685
    %v687 = vcombine.low %v161, %v165
    %v688 = vcombine.low %v169, %v173
    %v689 = vcombine.low %v177, %v181
    %v690 = vcombine.low %v185, %v189
    %v692 = vunpack.c.l.s4 1966171168
    %v693 = vunpack.c.0.s8 %v692
    %v694 = vlaneseq
    %v695 = vshrl.u32 %v694, 7
    %v696 = vsub.s32 %v693, %v695
    %v697 = vrot.slane %v687, %v696
    %v699 = vunpack.c.l.s4 1966171168
    %v700 = vunpack.c.0.s8 %v699
    %v701 = vlaneseq
    %v702 = vshrl.u32 %v701, 7
    %v703 = vsub.s32 %v700, %v702
    %v704 = vrot.slane %v688, %v703
    %v706 = vunpack.c.l.s4 1966171168
    %v707 = vunpack.c.0.s8 %v706
    %v708 = vlaneseq
    %v709 = vshrl.u32 %v708, 7
    %v710 = vsub.s32 %v707, %v709
    %v711 = vrot.slane %v689, %v710
    %v713 = vunpack.c.l.s4 1966171168
    %v714 = vunpack.c.0.s8 %v713
    %v715 = vlaneseq
    %v716 = vshrl.u32 %v715, 7
    %v717 = vsub.s32 %v714, %v716
    %v718 = vrot.slane %v690, %v717
    %v719 = vcombine.low %v697, %v704
    %v720 = vcombine.low %v711, %v718
    %v722 = vunpack.c.l.s4 1966171168
    %v723 = vunpack.c.0.s8 %v722
    %v724 = vlaneseq
    %v725 = vshrl.u32 %v724, 7
    %v726 = vsub.s32 %v723, %v725
    %v727 = vrot.slane %v719, %v726
    %v729 = vunpack.c.l.s4 1966171168
    %v730 = vunpack.c.0.s8 %v729
    %v731 = vlaneseq
    %v732 = vshrl.u32 %v731, 7
    %v733 = vsub.s32 %v730, %v732
    %v734 = vrot.slane %v720, %v733
    %v735 = vcombine.low %v727, %v734
    %v736 = vcombine.low %v193, %v197
    %v737 = vcombine.low %v201, %v205
    %v738 = vcombine.low %v209, %v213
    %v739 = vcombine.low %v217, %v221
    %v741 = vunpack.c.l.s4 1966171168
    %v742 = vunpack.c.0.s8 %v741
    %v743 = vlaneseq
    %v744 = vshrl.u32 %v743, 7
    %v745 = vsub.s32 %v742, %v744
    %v746 = vrot.slane %v736, %v745
    %v748 = vunpack.c.l.s4 1966171168
    %v749 = vunpack.c.0.s8 %v748
    %v750 = vlaneseq
    %v751 = vshrl.u32 %v750, 7
    %v752 = vsub.s32 %v749, %v751
    %v753 = vrot.slane %v737, %v752
    %v755 = vunpack.c.l.s4 1966171168
    %v756 = vunpack.c.0.s8 %v755
    %v757 = vlaneseq
    %v758 = vshrl.u32 %v757, 7
    %v759 = vsub.s32 %v756, %v758
    %v760 = vrot.slane %v738, %v759
    %v762 = vunpack.c.l.s4 1966171168
    %v763 = vunpack.c.0.s8 %v762
    %v764 = vlaneseq
    %v765 = vshrl.u32 %v764, 7
    %v766 = vsub.s32 %v763, %v765
    %v767 = vrot.slane %v739, %v766
    %v768 = vcombine.low %v746, %v753
    %v769 = vcombine.low %v760, %v767
    %v771 = vunpack.c.l.s4 1966171168
    %v772 = vunpack.c.0.s8 %v771
    %v773 = vlaneseq
    %v774 = vshrl.u32 %v773, 7
    %v775 = vsub.s32 %v772, %v774
    %v776 = vrot.slane %v768, %v775
    %v778 = vunpack.c.l.s4 1966171168
    %v779 = vunpack.c.0.s8 %v778
    %v780 = vlaneseq
    %v781 = vshrl.u32 %v780, 7
    %v782 = vsub.s32 %v779, %v781
    %v783 = vrot.slane %v769, %v782
    %v784 = vcombine.low %v776, %v783
    %v785 = vcombine.low %v225, %v229
    %v786 = vcombine.low %v233, %v237
    %v787 = vcombine.low %v241, %v245
    %v788 = vcombine.low %v249, %v253
    %v790 = vunpack.c.l.s4 1966171168
    %v791 = vunpack.c.0.s8 %v790
    %v792 = vlaneseq
    %v793 = vshrl.u32 %v792, 7
    %v794 = vsub.s32 %v791, %v793
    %v795 = vrot.slane %v785, %v794
    %v797 = vunpack.c.l.s4 1966171168
    %v798 = vunpack.c.0.s8 %v797
    %v799 = vlaneseq
    %v800 = vshrl.u32 %v799, 7
    %v801 = vsub.s32 %v798, %v800
    %v802 = vrot.slane %v786, %v801
    %v804 = vunpack.c.l.s4 1966171168
    %v805 = vunpack.c.0.s8 %v804
    %v806 = vlaneseq
    %v807 = vshrl.u32 %v806, 7
    %v808 = vsub.s32 %v805, %v807
    %v809 = vrot.slane %v787, %v808
    %v811 = vunpack.c.l.s4 1966171168
    %v812 = vunpack.c.0.s8 %v811
    %v813 = vlaneseq
    %v814 = vshrl.u32 %v813, 7
    %v815 = vsub.s32 %v812, %v814
    %v816 = vrot.slane %v788, %v815
    %v817 = vcombine.low %v795, %v802
    %v818 = vcombine.low %v809, %v816
    %v820 = vunpack.c.l.s4 1966171168
    %v821 = vunpack.c.0.s8 %v820
    %v822 = vlaneseq
    %v823 = vshrl.u32 %v822, 7
    %v824 = vsub.s32 %v821, %v823
    %v825 = vrot.slane %v817, %v824
    %v827 = vunpack.c.l.s4 1966171168
    %v828 = vunpack.c.0.s8 %v827
    %v829 = vlaneseq
    %v830 = vshrl.u32 %v829, 7
    %v831 = vsub.s32 %v828, %v830
    %v832 = vrot.slane %v818, %v831
    %v833 = vcombine.low %v825, %v832
    %v834 = vcombine.low %v257, %v261
    %v835 = vcombine.low %v265, %v269
    %v836 = vcombine.low %v273, %v277
    %v837 = vcombine.low %v281, %v285
    %v839 = vunpack.c.l.s4 1966171168
    %v840 = vunpack.c.0.s8 %v839
    %v841 = vlaneseq
    %v842 = vshrl.u32 %v841, 7
    %v843 = vsub.s32 %v840, %v842
    %v844 = vrot.slane %v834, %v843
    %v846 = vunpack.c.l.s4 1966171168
    %v847 = vunpack.c.0.s8 %v846
    %v848 = vlaneseq
    %v849 = vshrl.u32 %v848, 7
    %v850 = vsub.s32 %v847, %v849
    %v851 = vrot.slane %v835, %v850
    %v853 = vunpack.c.l.s4 1966171168
    %v854 = vunpack.c.0.s8 %v853
    %v855 = vlaneseq
    %v856 = vshrl.u32 %v855, 7
    %v857 = vsub.s32 %v854, %v856
    %v858 = vrot.slane %v836, %v857
    %v860 = vunpack.c.l.s4 1966171168
    %v861 = vunpack.c.0.s8 %v860
    %v862 = vlaneseq
    %v863 = vshrl.u32 %v862, 7
    %v864 = vsub.s32 %v861, %v863
    %v865 = vrot.slane %v837, %v864
    %v866 = vcombine.low %v844, %v851
    %v867 = vcombine.low %v858, %v865
    %v869 = vunpack.c.l.s4 1966171168
    %v870 = vunpack.c.0.s8 %v869
    %v871 = vlaneseq
    %v872 = vshrl.u32 %v871, 7
    %v873 = vsub.s32 %v870, %v872
    %v874 = vrot.slane %v866, %v873
    %v876 = vunpack.c.l.s4 1966171168
    %v877 = vunpack.c.0.s8 %v876
    %v878 = vlaneseq
    %v879 = vshrl.u32 %v878, 7
    %v880 = vsub.s32 %v877, %v879
    %v881 = vrot.slane %v867, %v880
    %v882 = vcombine.low %v874, %v881
    %v883 = vcombine.low %v289, %v293
    %v884 = vcombine.low %v297, %v301
    %v885 = vcombine.low %v305, %v309
    %v886 = vcombine.low %v313, %v317
    %v888 = vunpack.c.l.s4 1966171168
    %v889 = vunpack.c.0.s8 %v888
    %v890 = vlaneseq
    %v891 = vshrl.u32 %v890, 7
    %v892 = vsub.s32 %v889, %v891
    %v893 = vrot.slane %v883, %v892
    %v895 = vunpack.c.l.s4 1966171168
    %v896 = vunpack.c.0.s8 %v895
    %v897 = vlaneseq
    %v898 = vshrl.u32 %v897, 7
    %v899 = vsub.s32 %v896, %v898
    %v900 = vrot.slane %v884, %v899
    %v902 = vunpack.c.l.s4 1966171168
    %v903 = vunpack.c.0.s8 %v902
    %v904 = vlaneseq
    %v905 = vshrl.u32 %v904, 7
    %v906 = vsub.s32 %v903, %v905
    %v907 = vrot.slane %v885, %v906
    %v909 = vunpack.c.l.s4 1966171168
    %v910 = vunpack.c.0.s8 %v909
    %v911 = vlaneseq
    %v912 = vshrl.u32 %v911, 7
    %v913 = vsub.s32 %v910, %v912
    %v914 = vrot.slane %v886, %v913
    %v915 = vcombine.low %v893, %v900
    %v916 = vcombine.low %v907, %v914
    %v918 = vunpack.c.l.s4 1966171168
    %v919 = vunpack.c.0.s8 %v918
    %v920 = vlaneseq
    %v921 = vshrl.u32 %v920, 7
    %v922 = vsub.s32 %v919, %v921
    %v923 = vrot.slane %v915, %v922
    %v925 = vunpack.c.l.s4 1966171168
    %v926 = vunpack.c.0.s8 %v925
    %v927 = vlaneseq
    %v928 = vshrl.u32 %v927, 7
    %v929 = vsub.s32 %v926, %v928
    %v930 = vrot.slane %v916, %v929
    %v931 = vcombine.low %v923, %v930
    %v932 = vcombine.low %v321, %v325
    %v933 = vcombine.low %v329, %v333
    %v934 = vcombine.low %v337, %v341
    %v935 = vcombine.low %v345, %v349
    %v937 = vunpack.c.l.s4 1966171168
    %v938 = vunpack.c.0.s8 %v937
    %v939 = vlaneseq
    %v940 = vshrl.u32 %v939, 7
    %v941 = vsub.s32 %v938, %v940
    %v942 = vrot.slane %v932, %v941
    %v944 = vunpack.c.l.s4 1966171168
    %v945 = vunpack.c.0.s8 %v944
    %v946 = vlaneseq
    %v947 = vshrl.u32 %v946, 7
    %v948 = vsub.s32 %v945, %v947
    %v949 = vrot.slane %v933, %v948
    %v951 = vunpack.c.l.s4 1966171168
    %v952 = vunpack.c.0.s8 %v951
    %v953 = vlaneseq
    %v954 = vshrl.u32 %v953, 7
    %v955 = vsub.s32 %v952, %v954
    %v956 = vrot.slane %v934, %v955
    %v958 = vunpack.c.l.s4 1966171168
    %v959 = vunpack.c.0.s8 %v958
    %v960 = vlaneseq
    %v961 = vshrl.u32 %v960, 7
    %v962 = vsub.s32 %v959, %v961
    %v963 = vrot.slane %v935, %v962
    %v964 = vcombine.low %v942, %v949
    %v965 = vcombine.low %v956, %v963
    %v967 = vunpack.c.l.s4 1966171168
    %v968 = vunpack.c.0.s8 %v967
    %v969 = vlaneseq
    %v970 = vshrl.u32 %v969, 7
    %v971 = vsub.s32 %v968, %v970
    %v972 = vrot.slane %v964, %v971
    %v974 = vunpack.c.l.s4 1966171168
    %v975 = vunpack.c.0.s8 %v974
    %v976 = vlaneseq
    %v977 = vshrl.u32 %v976, 7
    %v978 = vsub.s32 %v975, %v977
    %v979 = vrot.slane %v965, %v978
    %v980 = vcombine.low %v972, %v979
    %v981 = vcombine.low %v353, %v357
    %v982 = vcombine.low %v361, %v365
    %v983 = vcombine.low %v369, %v373
    %v984 = vcombine.low %v377, %v381
    %v986 = vunpack.c.l.s4 1966171168
    %v987 = vunpack.c.0.s8 %v986
    %v988 = vlaneseq
    %v989 = vshrl.u32 %v988, 7
    %v990 = vsub.s32 %v987, %v989
    %v991 = vrot.slane %v981, %v990
    %v993 = vunpack.c.l.s4 1966171168
    %v994 = vunpack.c.0.s8 %v993
    %v995 = vlaneseq
    %v996 = vshrl.u32 %v995, 7
    %v997 = vsub.s32 %v994, %v996
    %v998 = vrot.slane %v982, %v997
    %v1000 = vunpack.c.l.s4 1966171168
    %v1001 = vunpack.c.0.s8 %v1000
    %v1002 = vlaneseq
    %v1003 = vshrl.u32 %v1002, 7
    %v1004 = vsub.s32 %v1001, %v1003
    %v1005 = vrot.slane %v983, %v1004
    %v1007 = vunpack.c.l.s4 1966171168
    %v1008 = vunpack.c.0.s8 %v1007
    %v1009 = vlaneseq
    %v1010 = vshrl.u32 %v1009, 7
    %v1011 = vsub.s32 %v1008, %v1010
    %v1012 = vrot.slane %v984, %v1011
    %v1013 = vcombine.low %v991, %v998
    %v1014 = vcombine.low %v1005, %v1012
    %v1016 = vunpack.c.l.s4 1966171168
    %v1017 = vunpack.c.0.s8 %v1016
    %v1018 = vlaneseq
    %v1019 = vshrl.u32 %v1018, 7
    %v1020 = vsub.s32 %v1017, %v1019
    %v1021 = vrot.slane %v1013, %v1020
    %v1023 = vunpack.c.l.s4 1966171168
    %v1024 = vunpack.c.0.s8 %v1023
    %v1025 = vlaneseq
    %v1026 = vshrl.u32 %v1025, 7
    %v1027 = vsub.s32 %v1024, %v1026
    %v1028 = vrot.slane %v1014, %v1027
    %v1029 = vcombine.low %v1021, %v1028
    %v1030 = vcombine.low %v385, %v389
    %v1031 = vcombine.low %v393, %v397
    %v1032 = vcombine.low %v401, %v405
    %v1033 = vcombine.low %v409, %v413
    %v1035 = vunpack.c.l.s4 1966171168
    %v1036 = vunpack.c.0.s8 %v1035
    %v1037 = vlaneseq
    %v1038 = vshrl.u32 %v1037, 7
    %v1039 = vsub.s32 %v1036, %v1038
    %v1040 = vrot.slane %v1030, %v1039
    %v1042 = vunpack.c.l.s4 1966171168
    %v1043 = vunpack.c.0.s8 %v1042
    %v1044 = vlaneseq
    %v1045 = vshrl.u32 %v1044, 7
    %v1046 = vsub.s32 %v1043, %v1045
    %v1047 = vrot.slane %v1031, %v1046
    %v1049 = vunpack.c.l.s4 1966171168
    %v1050 = vunpack.c.0.s8 %v1049
    %v1051 = vlaneseq
    %v1052 = vshrl.u32 %v1051, 7
    %v1053 = vsub.s32 %v1050, %v1052
    %v1054 = vrot.slane %v1032, %v1053
    %v1056 = vunpack.c.l.s4 1966171168
    %v1057 = vunpack.c.0.s8 %v1056
    %v1058 = vlaneseq
    %v1059 = vshrl.u32 %v1058, 7
    %v1060 = vsub.s32 %v1057, %v1059
    %v1061 = vrot.slane %v1033, %v1060
    %v1062 = vcombine.low %v1040, %v1047
    %v1063 = vcombine.low %v1054, %v1061
    %v1065 = vunpack.c.l.s4 1966171168
    %v1066 = vunpack.c.0.s8 %v1065
    %v1067 = vlaneseq
    %v1068 = vshrl.u32 %v1067, 7
    %v1069 = vsub.s32 %v1066, %v1068
    %v1070 = vrot.slane %v1062, %v1069
    %v1072 = vunpack.c.l.s4 1966171168
    %v1073 = vunpack.c.0.s8 %v1072
    %v1074 = vlaneseq
    %v1075 = vshrl.u32 %v1074, 7
    %v1076 = vsub.s32 %v1073, %v1075
    %v1077 = vrot.slane %v1063, %v1076
    %v1078 = vcombine.low %v1070, %v1077
    %v1079 = vcombine.low %v417, %v421
    %v1080 = vcombine.low %v425, %v429
    %v1081 = vcombine.low %v433, %v437
    %v1082 = vcombine.low %v441, %v445
    %v1084 = vunpack.c.l.s4 1966171168
    %v1085 = vunpack.c.0.s8 %v1084
    %v1086 = vlaneseq
    %v1087 = vshrl.u32 %v1086, 7
    %v1088 = vsub.s32 %v1085, %v1087
    %v1089 = vrot.slane %v1079, %v1088
    %v1091 = vunpack.c.l.s4 1966171168
    %v1092 = vunpack.c.0.s8 %v1091
    %v1093 = vlaneseq
    %v1094 = vshrl.u32 %v1093, 7
    %v1095 = vsub.s32 %v1092, %v1094
    %v1096 = vrot.slane %v1080, %v1095
    %v1098 = vunpack.c.l.s4 1966171168
    %v1099 = vunpack.c.0.s8 %v1098
    %v1100 = vlaneseq
    %v1101 = vshrl.u32 %v1100, 7
    %v1102 = vsub.s32 %v1099, %v1101
    %v1103 = vrot.slane %v1081, %v1102
    %v1105 = vunpack.c.l.s4 1966171168
    %v1106 = vunpack.c.0.s8 %v1105
    %v1107 = vlaneseq
    %v1108 = vshrl.u32 %v1107, 7
    %v1109 = vsub.s32 %v1106, %v1108
    %v1110 = vrot.slane %v1082, %v1109
    %v1111 = vcombine.low %v1089, %v1096
    %v1112 = vcombine.low %v1103, %v1110
    %v1114 = vunpack.c.l.s4 1966171168
    %v1115 = vunpack.c.0.s8 %v1114
    %v1116 = vlaneseq
    %v1117 = vshrl.u32 %v1116, 7
    %v1118 = vsub.s32 %v1115, %v1117
    %v1119 = vrot.slane %v1111, %v1118
    %v1121 = vunpack.c.l.s4 1966171168
    %v1122 = vunpack.c.0.s8 %v1121
    %v1123 = vlaneseq
    %v1124 = vshrl.u32 %v1123, 7
    %v1125 = vsub.s32 %v1122, %v1124
    %v1126 = vrot.slane %v1112, %v1125
    %v1127 = vcombine.low %v1119, %v1126
    %v1128 = vcombine.low %v449, %v453
    %v1129 = vcombine.low %v457, %v461
    %v1130 = vcombine.low %v465, %v469
    %v1131 = vcombine.low %v473, %v477
    %v1133 = vunpack.c.l.s4 1966171168
    %v1134 = vunpack.c.0.s8 %v1133
    %v1135 = vlaneseq
    %v1136 = vshrl.u32 %v1135, 7
    %v1137 = vsub.s32 %v1134, %v1136
    %v1138 = vrot.slane %v1128, %v1137
    %v1140 = vunpack.c.l.s4 1966171168
    %v1141 = vunpack.c.0.s8 %v1140
    %v1142 = vlaneseq
    %v1143 = vshrl.u32 %v1142, 7
    %v1144 = vsub.s32 %v1141, %v1143
    %v1145 = vrot.slane %v1129, %v1144
    %v1147 = vunpack.c.l.s4 1966171168
    %v1148 = vunpack.c.0.s8 %v1147
    %v1149 = vlaneseq
    %v1150 = vshrl.u32 %v1149, 7
    %v1151 = vsub.s32 %v1148, %v1150
    %v1152 = vrot.slane %v1130, %v1151
    %v1154 = vunpack.c.l.s4 1966171168
    %v1155 = vunpack.c.0.s8 %v1154
    %v1156 = vlaneseq
    %v1157 = vshrl.u32 %v1156, 7
    %v1158 = vsub.s32 %v1155, %v1157
    %v1159 = vrot.slane %v1131, %v1158
    %v1160 = vcombine.low %v1138, %v1145
    %v1161 = vcombine.low %v1152, %v1159
    %v1163 = vunpack.c.l.s4 1966171168
    %v1164 = vunpack.c.0.s8 %v1163
    %v1165 = vlaneseq
    %v1166 = vshrl.u32 %v1165, 7
    %v1167 = vsub.s32 %v1164, %v1166
    %v1168 = vrot.slane %v1160, %v1167
    %v1170 = vunpack.c.l.s4 1966171168
    %v1171 = vunpack.c.0.s8 %v1170
    %v1172 = vlaneseq
    %v1173 = vshrl.u32 %v1172, 7
    %v1174 = vsub.s32 %v1171, %v1173
    %v1175 = vrot.slane %v1161, %v1174
    %v1176 = vcombine.low %v1168, %v1175
    %v1177 = vcombine.low %v481, %v485
    %v1178 = vcombine.low %v489, %v493
    %v1179 = vcombine.low %v497, %v501
    %v1180 = vcombine.low %v505, %v509
    %v1182 = vunpack.c.l.s4 1966171168
    %v1183 = vunpack.c.0.s8 %v1182
    %v1184 = vlaneseq
    %v1185 = vshrl.u32 %v1184, 7
    %v1186 = vsub.s32 %v1183, %v1185
    %v1187 = vrot.slane %v1177, %v1186
    %v1189 = vunpack.c.l.s4 1966171168
    %v1190 = vunpack.c.0.s8 %v1189
    %v1191 = vlaneseq
    %v1192 = vshrl.u32 %v1191, 7
    %v1193 = vsub.s32 %v1190, %v1192
    %v1194 = vrot.slane %v1178, %v1193
    %v1196 = vunpack.c.l.s4 1966171168
    %v1197 = vunpack.c.0.s8 %v1196
    %v1198 = vlaneseq
    %v1199 = vshrl.u32 %v1198, 7
    %v1200 = vsub.s32 %v1197, %v1199
    %v1201 = vrot.slane %v1179, %v1200
    %v1203 = vunpack.c.l.s4 1966171168
    %v1204 = vunpack.c.0.s8 %v1203
    %v1205 = vlaneseq
    %v1206 = vshrl.u32 %v1205, 7
    %v1207 = vsub.s32 %v1204, %v1206
    %v1208 = vrot.slane %v1180, %v1207
    %v1209 = vcombine.low %v1187, %v1194
    %v1210 = vcombine.low %v1201, %v1208
    %v1212 = vunpack.c.l.s4 1966171168
    %v1213 = vunpack.c.0.s8 %v1212
    %v1214 = vlaneseq
    %v1215 = vshrl.u32 %v1214, 7
    %v1216 = vsub.s32 %v1213, %v1215
    %v1217 = vrot.slane %v1209, %v1216
    %v1219 = vunpack.c.l.s4 1966171168
    %v1220 = vunpack.c.0.s8 %v1219
    %v1221 = vlaneseq
    %v1222 = vshrl.u32 %v1221, 7
    %v1223 = vsub.s32 %v1220, %v1222
    %v1224 = vrot.slane %v1210, %v1223
    %v1225 = vcombine.low %v1217, %v1224
    %v1226 = vcombine.low %v513, %v517
    %v1227 = vcombine.low %v521, %v525
    %v1228 = vcombine.low %v529, %v533
    %v1229 = vcombine.low %v537, %v541
    %v1231 = vunpack.c.l.s4 1966171168
    %v1232 = vunpack.c.0.s8 %v1231
    %v1233 = vlaneseq
    %v1234 = vshrl.u32 %v1233, 7
    %v1235 = vsub.s32 %v1232, %v1234
    %v1236 = vrot.slane %v1226, %v1235
    %v1238 = vunpack.c.l.s4 1966171168
    %v1239 = vunpack.c.0.s8 %v1238
    %v1240 = vlaneseq
    %v1241 = vshrl.u32 %v1240, 7
    %v1242 = vsub.s32 %v1239, %v1241
    %v1243 = vrot.slane %v1227, %v1242
    %v1245 = vunpack.c.l.s4 1966171168
    %v1246 = vunpack.c.0.s8 %v1245
    %v1247 = vlaneseq
    %v1248 = vshrl.u32 %v1247, 7
    %v1249 = vsub.s32 %v1246, %v1248
    %v1250 = vrot.slane %v1228, %v1249
    %v1252 = vunpack.c.l.s4 1966171168
    %v1253 = vunpack.c.0.s8 %v1252
    %v1254 = vlaneseq
    %v1255 = vshrl.u32 %v1254, 7
    %v1256 = vsub.s32 %v1253, %v1255
    %v1257 = vrot.slane %v1229, %v1256
    %v1258 = vcombine.low %v1236, %v1243
    %v1259 = vcombine.low %v1250, %v1257
    %v1261 = vunpack.c.l.s4 1966171168
    %v1262 = vunpack.c.0.s8 %v1261
    %v1263 = vlaneseq
    %v1264 = vshrl.u32 %v1263, 7
    %v1265 = vsub.s32 %v1262, %v1264
    %v1266 = vrot.slane %v1258, %v1265
    %v1268 = vunpack.c.l.s4 1966171168
    %v1269 = vunpack.c.0.s8 %v1268
    %v1270 = vlaneseq
    %v1271 = vshrl.u32 %v1270, 7
    %v1272 = vsub.s32 %v1269, %v1271
    %v1273 = vrot.slane %v1259, %v1272
    %v1274 = vcombine.low %v1266, %v1273
    %v1275 = vcombine.low %v545, %v549
    %v1276 = vcombine.low %v553, %v557
    %v1277 = vcombine.low %v561, %v565
    %v1278 = vcombine.low %v569, %v573
    %v1280 = vunpack.c.l.s4 1966171168
    %v1281 = vunpack.c.0.s8 %v1280
    %v1282 = vlaneseq
    %v1283 = vshrl.u32 %v1282, 7
    %v1284 = vsub.s32 %v1281, %v1283
    %v1285 = vrot.slane %v1275, %v1284
    %v1287 = vunpack.c.l.s4 1966171168
    %v1288 = vunpack.c.0.s8 %v1287
    %v1289 = vlaneseq
    %v1290 = vshrl.u32 %v1289, 7
    %v1291 = vsub.s32 %v1288, %v1290
    %v1292 = vrot.slane %v1276, %v1291
    %v1294 = vunpack.c.l.s4 1966171168
    %v1295 = vunpack.c.0.s8 %v1294
    %v1296 = vlaneseq
    %v1297 = vshrl.u32 %v1296, 7
    %v1298 = vsub.s32 %v1295, %v1297
    %v1299 = vrot.slane %v1277, %v1298
    %v1301 = vunpack.c.l.s4 1966171168
    %v1302 = vunpack.c.0.s8 %v1301
    %v1303 = vlaneseq
    %v1304 = vshrl.u32 %v1303, 7
    %v1305 = vsub.s32 %v1302, %v1304
    %v1306 = vrot.slane %v1278, %v1305
    %v1307 = vcombine.low %v1285, %v1292
    %v1308 = vcombine.low %v1299, %v1306
    %v1310 = vunpack.c.l.s4 1966171168
    %v1311 = vunpack.c.0.s8 %v1310
    %v1312 = vlaneseq
    %v1313 = vshrl.u32 %v1312, 7
    %v1314 = vsub.s32 %v1311, %v1313
    %v1315 = vrot.slane %v1307, %v1314
    %v1317 = vunpack.c.l.s4 1966171168
    %v1318 = vunpack.c.0.s8 %v1317
    %v1319 = vlaneseq
    %v1320 = vshrl.u32 %v1319, 7
    %v1321 = vsub.s32 %v1318, %v1320
    %v1322 = vrot.slane %v1308, %v1321
    %v1323 = vcombine.low %v1315, %v1322
    %v1324 = vcombine.low %v577, %v581
    %v1325 = vcombine.low %v585, %v589
    %v1326 = vcombine.low %v593, %v597
    %v1327 = vcombine.low %v601, %v605
    %v1329 = vunpack.c.l.s4 1966171168
    %v1330 = vunpack.c.0.s8 %v1329
    %v1331 = vlaneseq
    %v1332 = vshrl.u32 %v1331, 7
    %v1333 = vsub.s32 %v1330, %v1332
    %v1334 = vrot.slane %v1324, %v1333
    %v1336 = vunpack.c.l.s4 1966171168
    %v1337 = vunpack.c.0.s8 %v1336
    %v1338 = vlaneseq
    %v1339 = vshrl.u32 %v1338, 7
    %v1340 = vsub.s32 %v1337, %v1339
    %v1341 = vrot.slane %v1325, %v1340
    %v1343 = vunpack.c.l.s4 1966171168
    %v1344 = vunpack.c.0.s8 %v1343
    %v1345 = vlaneseq
    %v1346 = vshrl.u32 %v1345, 7
    %v1347 = vsub.s32 %v1344, %v1346
    %v1348 = vrot.slane %v1326, %v1347
    %v1350 = vunpack.c.l.s4 1966171168
    %v1351 = vunpack.c.0.s8 %v1350
    %v1352 = vlaneseq
    %v1353 = vshrl.u32 %v1352, 7
    %v1354 = vsub.s32 %v1351, %v1353
    %v1355 = vrot.slane %v1327, %v1354
    %v1356 = vcombine.low %v1334, %v1341
    %v1357 = vcombine.low %v1348, %v1355
    %v1359 = vunpack.c.l.s4 1966171168
    %v1360 = vunpack.c.0.s8 %v1359
    %v1361 = vlaneseq
    %v1362 = vshrl.u32 %v1361, 7
    %v1363 = vsub.s32 %v1360, %v1362
    %v1364 = vrot.slane %v1356, %v1363
    %v1366 = vunpack.c.l.s4 1966171168
    %v1367 = vunpack.c.0.s8 %v1366
    %v1368 = vlaneseq
    %v1369 = vshrl.u32 %v1368, 7
    %v1370 = vsub.s32 %v1367, %v1369
    %v1371 = vrot.slane %v1357, %v1370
    %v1372 = vcombine.low %v1364, %v1371
    %v1373 = vcombine.low %v609, %v613
    %v1374 = vcombine.low %v617, %v621
    %v1375 = vcombine.low %v625, %v629
    %v1376 = vcombine.low %v633, %v637
    %v1378 = vunpack.c.l.s4 1966171168
    %v1379 = vunpack.c.0.s8 %v1378
    %v1380 = vlaneseq
    %v1381 = vshrl.u32 %v1380, 7
    %v1382 = vsub.s32 %v1379, %v1381
    %v1383 = vrot.slane %v1373, %v1382
    %v1385 = vunpack.c.l.s4 1966171168
    %v1386 = vunpack.c.0.s8 %v1385
    %v1387 = vlaneseq
    %v1388 = vshrl.u32 %v1387, 7
    %v1389 = vsub.s32 %v1386, %v1388
    %v1390 = vrot.slane %v1374, %v1389
    %v1392 = vunpack.c.l.s4 1966171168
    %v1393 = vunpack.c.0.s8 %v1392
    %v1394 = vlaneseq
    %v1395 = vshrl.u32 %v1394, 7
    %v1396 = vsub.s32 %v1393, %v1395
    %v1397 = vrot.slane %v1375, %v1396
    %v1399 = vunpack.c.l.s4 1966171168
    %v1400 = vunpack.c.0.s8 %v1399
    %v1401 = vlaneseq
    %v1402 = vshrl.u32 %v1401, 7
    %v1403 = vsub.s32 %v1400, %v1402
    %v1404 = vrot.slane %v1376, %v1403
    %v1405 = vcombine.low %v1383, %v1390
    %v1406 = vcombine.low %v1397, %v1404
    %v1408 = vunpack.c.l.s4 1966171168
    %v1409 = vunpack.c.0.s8 %v1408
    %v1410 = vlaneseq
    %v1411 = vshrl.u32 %v1410, 7
    %v1412 = vsub.s32 %v1409, %v1411
    %v1413 = vrot.slane %v1405, %v1412
    %v1415 = vunpack.c.l.s4 1966171168
    %v1416 = vunpack.c.0.s8 %v1415
    %v1417 = vlaneseq
    %v1418 = vshrl.u32 %v1417, 7
    %v1419 = vsub.s32 %v1416, %v1418
    %v1420 = vrot.slane %v1406, %v1419
    %v1421 = vcombine.low %v1413, %v1420
    %1422 = vset.pattern.permute.xlu0 0
    %1423 = vperm.xlu0 %1422, %v686
    %v1424 = vpop.permute.xlu0 %1423
    %1425 = vset.pattern.permute.xlu0 0
    %1426 = vperm.xlu0 %1425, %v735
    %v1427 = vpop.permute.xlu0 %1426
    %1428 = vset.pattern.permute.xlu0 0
    %1429 = vperm.xlu0 %1428, %v784
    %v1430 = vpop.permute.xlu0 %1429
    %1431 = vset.pattern.permute.xlu0 0
    %1432 = vperm.xlu0 %1431, %v833
    %v1433 = vpop.permute.xlu0 %1432
    %1434 = vset.pattern.permute.xlu0 0
    %1435 = vperm.xlu0 %1434, %v882
    %v1436 = vpop.permute.xlu0 %1435
    %1437 = vset.pattern.permute.xlu0 0
    %1438 = vperm.xlu0 %1437, %v931
    %v1439 = vpop.permute.xlu0 %1438
    %1440 = vset.pattern.permute.xlu0 0
    %1441 = vperm.xlu0 %1440, %v980
    %v1442 = vpop.permute.xlu0 %1441
    %1443 = vset.pattern.permute.xlu0 0
    %1444 = vperm.xlu0 %1443, %v1029
    %v1445 = vpop.permute.xlu0 %1444
    %1446 = vset.pattern.permute.xlu0 0
    %1447 = vperm.xlu0 %1446, %v1078
    %v1448 = vpop.permute.xlu0 %1447
    %1449 = vset.pattern.permute.xlu0 0
    %1450 = vperm.xlu0 %1449, %v1127
    %v1451 = vpop.permute.xlu0 %1450
    %1452 = vset.pattern.permute.xlu0 0
    %1453 = vperm.xlu0 %1452, %v1176
    %v1454 = vpop.permute.xlu0 %1453
    %1455 = vset.pattern.permute.xlu0 0
    %1456 = vperm.xlu0 %1455, %v1225
    %v1457 = vpop.permute.xlu0 %1456
    %1458 = vset.pattern.permute.xlu0 0
    %1459 = vperm.xlu0 %1458, %v1274
    %v1460 = vpop.permute.xlu0 %1459
    %1461 = vset.pattern.permute.xlu0 0
    %1462 = vperm.xlu0 %1461, %v1323
    %v1463 = vpop.permute.xlu0 %1462
    %1464 = vset.pattern.permute.xlu0 0
    %1465 = vperm.xlu0 %1464, %v1372
    %v1466 = vpop.permute.xlu0 %1465
    %1467 = vset.pattern.permute.xlu0 0
    %1468 = vperm.xlu0 %1467, %v1421
    %v1469 = vpop.permute.xlu0 %1468
    %v1470 = vlaneseq
    %v1471 = vand.u32 %v1470, 127
    %v1472 = vlaneseq
    %v1473 = vshrl.u32 %v1472, 7
    %v1474 = vsub.s32 %v1471, %v1473
    %v1475 = vrot.slane %v1424, %v1474
    %v1476 = vadd.s32 %v1471, 4294967288
    %v1477 = vlaneseq
    %v1478 = vshrl.u32 %v1477, 7
    %v1479 = vsub.s32 %v1476, %v1478
    %v1480 = vrot.slane %v1427, %v1479
    %vm1481 = vcmask 130112
    %v1482 = vsel %vm1481, %v1480, %v1475
    %v1483 = vadd.s32 %v1471, 4294967280
    %v1484 = vlaneseq
    %v1485 = vshrl.u32 %v1484, 7
    %v1486 = vsub.s32 %v1483, %v1485
    %v1487 = vrot.slane %v1430, %v1486
    %vm1488 = vcmask 195712
    %v1489 = vsel %vm1488, %v1487, %v1482
    %v1490 = vadd.s32 %v1471, 4294967272
    %v1491 = vlaneseq
    %v1492 = vshrl.u32 %v1491, 7
    %v1493 = vsub.s32 %v1490, %v1492
    %v1494 = vrot.slane %v1433, %v1493
    %vm1495 = vcmask 261312
    %v1496 = vsel %vm1495, %v1494, %v1489
    %v1497 = vadd.s32 %v1471, 4294967264
    %v1498 = vlaneseq
    %v1499 = vshrl.u32 %v1498, 7
    %v1500 = vsub.s32 %v1497, %v1499
    %v1501 = vrot.slane %v1436, %v1500
    %vm1502 = vcmask 326912
    %v1503 = vsel %vm1502, %v1501, %v1496
    %v1504 = vadd.s32 %v1471, 4294967256
    %v1505 = vlaneseq
    %v1506 = vshrl.u32 %v1505, 7
    %v1507 = vsub.s32 %v1504, %v1506
    %v1508 = vrot.slane %v1439, %v1507
    %vm1509 = vcmask 392512
    %v1510 = vsel %vm1509, %v1508, %v1503
    %v1511 = vadd.s32 %v1471, 4294967248
    %v1512 = vlaneseq
    %v1513 = vshrl.u32 %v1512, 7
    %v1514 = vsub.s32 %v1511, %v1513
    %v1515 = vrot.slane %v1442, %v1514
    %vm1516 = vcmask 458112
    %v1517 = vsel %vm1516, %v1515, %v1510
    %v1518 = vadd.s32 %v1471, 4294967240
    %v1519 = vlaneseq
    %v1520 = vshrl.u32 %v1519, 7
    %v1521 = vsub.s32 %v1518, %v1520
    %v1522 = vrot.slane %v1445, %v1521
    %vm1523 = vcmask 523712
    %v1524 = vsel %vm1523, %v1522, %v1517
    %v1525 = vadd.s32 %v1471, 4294967232
    %v1526 = vlaneseq
    %v1527 = vshrl.u32 %v1526, 7
    %v1528 = vsub.s32 %v1525, %v1527
    %v1529 = vrot.slane %v1448, %v1528
    %vm1530 = vcmask 589312
    %v1531 = vsel %vm1530, %v1529, %v1524
    %v1532 = vadd.s32 %v1471, 4294967224
    %v1533 = vlaneseq
    %v1534 = vshrl.u32 %v1533, 7
    %v1535 = vsub.s32 %v1532, %v1534
    %v1536 = vrot.slane %v1451, %v1535
    %vm1537 = vcmask 654912
    %v1538 = vsel %vm1537, %v1536, %v1531
    %v1539 = vadd.s32 %v1471, 4294967216
    %v1540 = vlaneseq
    %v1541 = vshrl.u32 %v1540, 7
    %v1542 = vsub.s32 %v1539, %v1541
    %v1543 = vrot.slane %v1454, %v1542
    %vm1544 = vcmask 720512
    %v1545 = vsel %vm1544, %v1543, %v1538
    %v1546 = vadd.s32 %v1471, 4294967208
    %v1547 = vlaneseq
    %v1548 = vshrl.u32 %v1547, 7
    %v1549 = vsub.s32 %v1546, %v1548
    %v1550 = vrot.slane %v1457, %v1549
    %vm1551 = vcmask 786112
    %v1552 = vsel %vm1551, %v1550, %v1545
    %v1553 = vadd.s32 %v1471, 4294967200
    %v1554 = vlaneseq
    %v1555 = vshrl.u32 %v1554, 7
    %v1556 = vsub.s32 %v1553, %v1555
    %v1557 = vrot.slane %v1460, %v1556
    %vm1558 = vcmask 851712
    %v1559 = vsel %vm1558, %v1557, %v1552
    %v1560 = vadd.s32 %v1471, 4294967192
    %v1561 = vlaneseq
    %v1562 = vshrl.u32 %v1561, 7
    %v1563 = vsub.s32 %v1560, %v1562
    %v1564 = vrot.slane %v1463, %v1563
    %vm1565 = vcmask 917312
    %v1566 = vsel %vm1565, %v1564, %v1559
    %v1567 = vadd.s32 %v1471, 4294967184
    %v1568 = vlaneseq
    %v1569 = vshrl.u32 %v1568, 7
    %v1570 = vsub.s32 %v1567, %v1569
    %v1571 = vrot.slane %v1466, %v1570
    %vm1572 = vcmask 982912
    %v1573 = vsel %vm1572, %v1571, %v1566
    %v1574 = vadd.s32 %v1471, 4294967176
    %v1575 = vlaneseq
    %v1576 = vshrl.u32 %v1575, 7
    %v1577 = vsub.s32 %v1574, %v1576
    %v1578 = vrot.slane %v1469, %v1577
    %vm1579 = vcmask 1048512
    %v1580 = vsel %vm1579, %v1578, %v1573
    %v1582 = vunpack.c.l.s4 1966171168
    %v1583 = vunpack.c.0.s8 %v1582
    %v1584 = vlaneseq
    %v1585 = vshrl.u32 %v1584, 7
    %v1586 = vsub.s32 %v1583, %v1585
    %v1587 = vrot.slane %v1580, %v1586
    %v1589 = vunpack.c.l.s4 1966171168
    %v1590 = vunpack.c.0.s8 %v1589
    %v1591 = vlaneseq
    %v1592 = vshrl.u32 %v1591, 7
    %v1593 = vsub.s32 %v1590, %v1592
    %v1594 = vrot.slane %v1587, %v1593
    %v1596 = vadd.f32 %v109, %v1594
    %1597 = vst [vmem:[#allocation2] sm:$0x1] %v1596
    // Predicated region
    $region18: #{tpu_custom_call.1} parent=1 // pred_check
      _
    $region19: #{tpu_custom_call.1} parent=1 // pred_check_branch
      %1599 = sbr.rel (0) target = $region21
    $region20: #{tpu_custom_call.1} parent=1 // pred_region
      %s1601 = ssub.s32 16, 16
      %1602 = vsyncadd [#allocation3], %s1601
      %s1604 = sshll.u32 [#allocation2], 4
      %s1605 = int_to_ptr.vmem [resolvable:$true] %s1604
      %1607 = dma.vmem_to_hbm [thread:$0]  %s1605, 16, %s3, [#allocation3]
    $region21: #{tpu_custom_call.1} parent=1 // pred_fallthru
      _
    // Predicated region
    $region22: #{tpu_custom_call.1} parent=1 // pred_check
      _
    $region23: #{tpu_custom_call.1} parent=1 // pred_check_branch
      %1609 = sbr.rel (0) target = $region25
    $region24: #{tpu_custom_call.1} parent=1 // pred_region
      %1610 = dma.done [#allocation3], 16
    $region25: #{tpu_custom_call.1} parent=1 // pred_fallthru
      _
    %1611 = vsyncpa [#allocation3], 1

</llo_original>
